<compile_context>
chip_gen: v7x
topology: tpu7x:2x2x1
jax: 0.10.0
libtpu: 0.0.40
codegen_flags: <defaults>
</compile_context>

<pallas_src>
import jax
import jax.numpy as jnp
from jax import lax
from jax.experimental import pallas as pl
from jax.experimental.pallas import tpu as pltpu  # noqa: F401  (TPU backend)


# ----------------------------------------------------------------------------
# Fused Pallas kernel: full PGCN forward
# ----------------------------------------------------------------------------
def _pgcn_fused_kernel(
    fg_ref, fd_ref,                 # raw node features           (Ng,Fg), (Nd,Fd)
    ag_ref, ad_ref,                 # concat normalized adjacency  (Ng,Ns), (Nd,Ns)  bf16
    wge_ref, wde_ref,               # embedding weights            (Fg,64), (Fd,64)
    w1g_ref, w1d_ref,               # layer-1 weights, lane-concat (64,128) each
    b1g_ref, b1d_ref,               # layer-1 biases               (1,64) each
    w2g_ref, w2d_ref,               # layer-2 weights, lane-concat (64,64) each
    b2g_ref, b2d_ref,               # layer-2 biases               (1,32) each
    wsT_ref,                        # scoring weight (transposed)  (32,32)
    out_ref,                        # scores                       (Ng,Nd)
):
    f32 = jnp.float32

    # --- input embeddings (nn.Linear, bias=False) ----------------------------
    hg = jnp.dot(fg_ref[...], wge_ref[...], preferred_element_type=f32)    # (Ng,64)
    hd = jnp.dot(fd_ref[...], wde_ref[...], preferred_element_type=f32)    # (Nd,64)

    # --- hetero layer 1: GraphConv(64,64) per relation, sum agg, +bias, ReLU -
    # Lane layout of the concatenated XW / weights:
    #   cols [ 0: 64] -> contribution destined for 'gene'    nodes
    #   cols [64:128] -> contribution destined for 'disease' nodes
    xwg = jnp.dot(hg, w1g_ref[...], preferred_element_type=f32)            # (Ng,128)
    xwd = jnp.dot(hd, w1d_ref[...], preferred_element_type=f32)            # (Nd,128)
    xw_all = jnp.concatenate([xwg, xwd], axis=0).astype(jnp.bfloat16)      # (Ns,128)
    agg_g = jnp.dot(ag_ref[...], xw_all, preferred_element_type=f32)       # (Ng,128)
    agg_d = jnp.dot(ad_ref[...], xw_all, preferred_element_type=f32)       # (Nd,128)
    hg = jnp.maximum(agg_g[:, :64] + b1g_ref[...], 0.0)                    # (Ng,64)
    hd = jnp.maximum(agg_d[:, 64:] + b1d_ref[...], 0.0)                    # (Nd,64)
    # dropout(p=0.1): identity at inference.

    # --- hetero layer 2: GraphConv(64,32) per relation -----------------------
    xwg = jnp.dot(hg, w2g_ref[...], preferred_element_type=f32)            # (Ng,64)
    xwd = jnp.dot(hd, w2d_ref[...], preferred_element_type=f32)            # (Nd,64)
    xw_all = jnp.concatenate([xwg, xwd], axis=0).astype(jnp.bfloat16)      # (Ns,64)
    agg_g = jnp.dot(ag_ref[...], xw_all, preferred_element_type=f32)       # (Ng,64)
    agg_d = jnp.dot(ad_ref[...], xw_all, preferred_element_type=f32)       # (Nd,64)
    hg = jnp.maximum(agg_g[:, :32] + b2g_ref[...], 0.0)                    # (Ng,32)
    hd = jnp.maximum(agg_d[:, 32:] + b2d_ref[...], 0.0)                    # (Nd,32)

    # --- scores: (h_gene @ W^T) @ h_disease^T (contract last dims, no .T) ----
    gw = jnp.dot(hg, wsT_ref[...], preferred_element_type=f32)             # (Ng,32)
    out_ref[...] = lax.dot_general(
        gw, hd, (((1,), (1,)), ((), ())), preferred_element_type=f32)      # (Ng,Nd)


def pgcn_forward(params, adj_gene_dst, adj_dis_dst, feat_gene, feat_dis):
    """One fused pallas_call for the whole PGCN forward.

    adj_gene_dst = [A_gg | A_dg]  (Ng, Ng+Nd)  normalized, bf16
    adj_dis_dst  = [A_gd | A_dd]  (Nd, Ng+Nd)  normalized, bf16
    """
    Ng = feat_gene.shape[0]
    Nd = feat_dis.shape[0]
    return pl.pallas_call(
        _pgcn_fused_kernel,
        out_shape=jax.ShapeDtypeStruct((Ng, Nd), jnp.float32),
    )(
        feat_gene.astype(jnp.float32),
        feat_dis.astype(jnp.float32),
        adj_gene_dst.astype(jnp.bfloat16),
        adj_dis_dst.astype(jnp.bfloat16),
        params["W_gene_emb"], params["W_dis_emb"],
        params["W1_g"], params["W1_d"], params["b1_gene"], params["b1_dis"],
        params["W2_g"], params["W2_d"], params["b2_gene"], params["b2_dis"],
        params["W_score_T"],
    )


# ----------------------------------------------------------------------------
# Glue: graph normalization, parameters, pure-JAX reference
# ----------------------------------------------------------------------------
def normalize_adj(A):
    """dgl GraphConv norm='both':  D_dst^{-1/2} A D_src^{-1/2}, degrees >= 1."""
    A = A.astype(jnp.float32)
    deg_dst = jnp.clip(A.sum(axis=1), 1.0, None)
    deg_src = jnp.clip(A.sum(axis=0), 1.0, None)
    return (deg_dst ** -0.5)[:, None] * A * (deg_src ** -0.5)[None, :]


def xavier_normal(key, shape, gain=1.0):
    fan_in, fan_out = shape
    std = gain * (2.0 / (fan_in + fan_out)) ** 0.5
    return std * jax.random.normal(key, shape, dtype=jnp.float32)


def xavier_uniform(key, shape, gain=1.0):
    fan_in, fan_out = shape
    a = gain * (6.0 / (fan_in + fan_out)) ** 0.5
    return jax.random.uniform(key, shape, minval=-a, maxval=a, dtype=jnp.float32)


def init_params(key, in_feats):
    ks = jax.random.split(key, 11)
    p = {}
    # input embeddings (nn.Linear bias=False); stored as (in, out): y = x @ W
    p["W_gene_emb"] = xavier_normal(ks[0], (in_feats[0], 64))
    p["W_dis_emb"] = xavier_normal(ks[1], (in_feats[1], 64))
    # layer 1: GraphConv(64, 64) per relation, xavier_normal, zero bias.
    # Lane-concat per SOURCE type: [W(src->gene) | W(src->disease)]
    W1_gg = xavier_normal(ks[2], (64, 64))   # gene    -> gene
    W1_gd = xavier_normal(ks[3], (64, 64))   # gene    -> disease
    W1_dg = xavier_normal(ks[4], (64, 64))   # disease -> gene
    W1_dd = xavier_normal(ks[5], (64, 64))   # disease -> disease
    p["W1_g"] = jnp.concatenate([W1_gg, W1_gd], axis=1)   # (64, 128)
    p["W1_d"] = jnp.concatenate([W1_dg, W1_dd], axis=1)   # (64, 128)
    p["b1_gene"] = jnp.zeros((1, 64), jnp.float32)         # b_gg + b_dg (zero init)
    p["b1_dis"] = jnp.zeros((1, 64), jnp.float32)          # b_gd + b_dd
    # layer 2: GraphConv(64, 32)
    W2_gg = xavier_normal(ks[6], (64, 32))
    W2_gd = xavier_normal(ks[7], (64, 32))
    W2_dg = xavier_normal(ks[8], (64, 32))
    W2_dd = xavier_normal(ks[9], (64, 32))
    p["W2_g"] = jnp.concatenate([W2_gg, W2_gd], axis=1)    # (64, 64)
    p["W2_d"] = jnp.concatenate([W2_dg, W2_dd], axis=1)    # (64, 64)
    p["b2_gene"] = jnp.zeros((1, 32), jnp.float32)
    p["b2_dis"] = jnp.zeros((1, 32), jnp.float32)
    # final nn.Linear(32, 32, bias=False), xavier_uniform; stored transposed.
    p["W_score_T"] = xavier_uniform(ks[10], (32, 32))
    return p


def pgcn_reference(params, adj, feat_gene, feat_dis):
    """Pure-JAX f32 reference mirroring the original per-relation module math."""
    W1_gg, W1_gd = params["W1_g"][:, :64], params["W1_g"][:, 64:]
    W1_dg, W1_dd = params["W1_d"][:, :64], params["W1_d"][:, 64:]
    W2_gg, W2_gd = params["W2_g"][:, :32], params["W2_g"][:, 32:]
    W2_dg, W2_dd = params["W2_d"][:, :32], params["W2_d"][:, 32:]
    hg = feat_gene @ params["W_gene_emb"]
    hd = feat_dis @ params["W_dis_emb"]
    hg1 = jnp.maximum(adj["gg"] @ (hg @ W1_gg) + adj["dg"] @ (hd @ W1_dg)
                      + params["b1_gene"], 0.0)
    hd1 = jnp.maximum(adj["gd"] @ (hg @ W1_gd) + adj["dd"] @ (hd @ W1_dd)
                      + params["b1_dis"], 0.0)
    hg2 = jnp.maximum(adj["gg"] @ (hg1 @ W2_gg) + adj["dg"] @ (hd1 @ W2_dg)
                      + params["b2_gene"], 0.0)
    hd2 = jnp.maximum(adj["gd"] @ (hg1 @ W2_gd) + adj["dd"] @ (hd1 @ W2_dd)
                      + params["b2_dis"], 0.0)
    return (hg2 @ params["W_score_T"]) @ hd2.T


if __name__ == "__main__":
    key = jax.random.PRNGKey(0)
    k_feat_g, k_feat_d, k_gg, k_gd, k_dd, k_param = jax.random.split(key, 6)

    # small synthetic problem
    N_GENE, N_DIS = 24, 16
    IN_FEATS = (20, 12)

    feat_gene = jax.random.normal(k_feat_g, (N_GENE, IN_FEATS[0]), dtype=jnp.float32)
    feat_dis = jax.random.normal(k_feat_d, (N_DIS, IN_FEATS[1]), dtype=jnp.float32)

    # synthetic binary adjacencies (dst x src), self-loops on homogeneous ones
    A_gg = (jax.random.uniform(k_gg, (N_GENE, N_GENE)) < 0.15).astype(jnp.float32)
    A_gg = jnp.maximum(A_gg, jnp.eye(N_GENE, dtype=jnp.float32))
    A_gd_edges = (jax.random.uniform(k_gd, (N_DIS, N_GENE)) < 0.2).astype(jnp.float32)
    A_dd = (jax.random.uniform(k_dd, (N_DIS, N_DIS)) < 0.2).astype(jnp.float32)
    A_dd = jnp.maximum(A_dd, jnp.eye(N_DIS, dtype=jnp.float32))

    adj = {
        "gg": normalize_adj(A_gg),          # gene    -> gene    : (Ng, Ng)
        "gd": normalize_adj(A_gd_edges),    # gene    -> disease : (Nd, Ng)
        "dg": normalize_adj(A_gd_edges.T),  # disease -> gene    : (Ng, Nd)
        "dd": normalize_adj(A_dd),          # disease -> disease : (Nd, Nd)
    }
    # column-concatenated adjacencies, one per DST type: [from_gene | from_dis]
    adj_gene_dst = jnp.concatenate([adj["gg"], adj["dg"]], axis=1)   # (Ng, Ng+Nd)
    adj_dis_dst = jnp.concatenate([adj["gd"], adj["dd"]], axis=1)    # (Nd, Ng+Nd)

    params = init_params(k_param, IN_FEATS)

    out = pgcn_forward(params, adj_gene_dst, adj_dis_dst, feat_gene, feat_dis)
    out = jax.block_until_ready(out)

    assert out.shape == (N_GENE, N_DIS)
    assert out.dtype == jnp.float32
    assert bool(jnp.all(jnp.isfinite(out)))

    # correctness vs f32 pure-JAX reference (loose tol: bf16 adjacency feed)
    ref = pgcn_reference(params, adj, feat_gene, feat_dis)
    assert bool(jnp.allclose(out, ref, rtol=5e-2, atol=5e-2)), (
        float(jnp.max(jnp.abs(out - ref))))

    print("KERNEL_OK")
</pallas_src>

<mosaic_0001>
module attributes {stable_mosaic.version = 11 : i64} {
  func.func @_pgcn_fused_kernel(%arg0: memref<24x20xf32, #tpu.memory_space<vmem>>, %arg1: memref<16x12xf32, #tpu.memory_space<vmem>>, %arg2: memref<24x40xbf16, #tpu.memory_space<vmem>>, %arg3: memref<16x40xbf16, #tpu.memory_space<vmem>>, %arg4: memref<20x64xf32, #tpu.memory_space<vmem>>, %arg5: memref<12x64xf32, #tpu.memory_space<vmem>>, %arg6: memref<64x128xf32, #tpu.memory_space<vmem>>, %arg7: memref<64x128xf32, #tpu.memory_space<vmem>>, %arg8: memref<1x64xf32, #tpu.memory_space<vmem>>, %arg9: memref<1x64xf32, #tpu.memory_space<vmem>>, %arg10: memref<64x64xf32, #tpu.memory_space<vmem>>, %arg11: memref<64x64xf32, #tpu.memory_space<vmem>>, %arg12: memref<1x32xf32, #tpu.memory_space<vmem>>, %arg13: memref<1x32xf32, #tpu.memory_space<vmem>>, %arg14: memref<32x32xf32, #tpu.memory_space<vmem>>, %arg15: memref<24x16xf32, #tpu.memory_space<vmem>>) attributes {dimension_semantics = [], scalar_prefetch = 0 : i64, scratch_operands = 0 : i64, tpu.core_type = #tpu.core_type<tc>} {
    %c0 = arith.constant 0 : index
    %c0_0 = arith.constant 0 : index
    %0 = vector.load %arg0[%c0, %c0_0] : memref<24x20xf32, #tpu.memory_space<vmem>>, vector<24x20xf32>
    %c0_1 = arith.constant 0 : index
    %c0_2 = arith.constant 0 : index
    %1 = vector.load %arg4[%c0_1, %c0_2] : memref<20x64xf32, #tpu.memory_space<vmem>>, vector<20x64xf32>
    %cst = arith.constant dense<0.000000e+00> : vector<24x64xf32>
    %2 = tpu.matmul %0, %1, %cst {dimension_numbers = #tpu.dot_dimension_numbers<[1], [0], [0], [1], [0, 0, 1, 1], [], []>} : vector<24x20xf32>, vector<20x64xf32>, vector<24x64xf32> -> vector<24x64xf32>
    %c0_3 = arith.constant 0 : index
    %c0_4 = arith.constant 0 : index
    %3 = vector.load %arg1[%c0_3, %c0_4] : memref<16x12xf32, #tpu.memory_space<vmem>>, vector<16x12xf32>
    %c0_5 = arith.constant 0 : index
    %c0_6 = arith.constant 0 : index
    %4 = vector.load %arg5[%c0_5, %c0_6] : memref<12x64xf32, #tpu.memory_space<vmem>>, vector<12x64xf32>
    %cst_7 = arith.constant dense<0.000000e+00> : vector<16x64xf32>
    %5 = tpu.matmul %3, %4, %cst_7 {dimension_numbers = #tpu.dot_dimension_numbers<[1], [0], [0], [1], [0, 0, 1, 1], [], []>} : vector<16x12xf32>, vector<12x64xf32>, vector<16x64xf32> -> vector<16x64xf32>
    %c0_8 = arith.constant 0 : index
    %c0_9 = arith.constant 0 : index
    %6 = vector.load %arg6[%c0_8, %c0_9] : memref<64x128xf32, #tpu.memory_space<vmem>>, vector<64x128xf32>
    %cst_10 = arith.constant dense<0.000000e+00> : vector<24x128xf32>
    %7 = tpu.matmul %2, %6, %cst_10 {dimension_numbers = #tpu.dot_dimension_numbers<[1], [0], [0], [1], [0, 0, 1, 1], [], []>} : vector<24x64xf32>, vector<64x128xf32>, vector<24x128xf32> -> vector<24x128xf32>
    %c0_11 = arith.constant 0 : index
    %c0_12 = arith.constant 0 : index
    %8 = vector.load %arg7[%c0_11, %c0_12] : memref<64x128xf32, #tpu.memory_space<vmem>>, vector<64x128xf32>
    %cst_13 = arith.constant dense<0.000000e+00> : vector<16x128xf32>
    %9 = tpu.matmul %5, %8, %cst_13 {dimension_numbers = #tpu.dot_dimension_numbers<[1], [0], [0], [1], [0, 0, 1, 1], [], []>} : vector<16x64xf32>, vector<64x128xf32>, vector<16x128xf32> -> vector<16x128xf32>
    %10 = tpu.concatenate %7, %9 in 0 : vector<24x128xf32>, vector<16x128xf32> -> vector<40x128xf32>
    %11 = arith.truncf %10 : vector<40x128xf32> to vector<40x128xbf16>
    %c0_14 = arith.constant 0 : index
    %c0_15 = arith.constant 0 : index
    %12 = vector.load %arg2[%c0_14, %c0_15] : memref<24x40xbf16, #tpu.memory_space<vmem>>, vector<24x40xbf16>
    %cst_16 = arith.constant dense<0.000000e+00> : vector<24x128xf32>
    %13 = tpu.matmul %12, %11, %cst_16 {dimension_numbers = #tpu.dot_dimension_numbers<[1], [0], [0], [1], [0, 0, 1, 1], [], []>} : vector<24x40xbf16>, vector<40x128xbf16>, vector<24x128xf32> -> vector<24x128xf32>
    %c0_17 = arith.constant 0 : index
    %c0_18 = arith.constant 0 : index
    %14 = vector.load %arg3[%c0_17, %c0_18] : memref<16x40xbf16, #tpu.memory_space<vmem>>, vector<16x40xbf16>
    %cst_19 = arith.constant dense<0.000000e+00> : vector<16x128xf32>
    %15 = tpu.matmul %14, %11, %cst_19 {dimension_numbers = #tpu.dot_dimension_numbers<[1], [0], [0], [1], [0, 0, 1, 1], [], []>} : vector<16x40xbf16>, vector<40x128xbf16>, vector<16x128xf32> -> vector<16x128xf32>
    %16 = vector.extract_strided_slice %13 {offsets = [0, 0], sizes = [24, 64], strides = [1, 1]} : vector<24x128xf32> to vector<24x64xf32>
    %c0_20 = arith.constant 0 : index
    %c0_21 = arith.constant 0 : index
    %17 = vector.load %arg8[%c0_20, %c0_21] : memref<1x64xf32, #tpu.memory_space<vmem>>, vector<1x64xf32>
    %18 = vector.broadcast %17 : vector<1x64xf32> to vector<24x64xf32>
    %19 = arith.addf %16, %18 : vector<24x64xf32>
    %cst_22 = arith.constant 0.000000e+00 : f32
    %20 = vector.broadcast %cst_22 : f32 to vector<24x64xf32>
    %21 = arith.maximumf %19, %20 : vector<24x64xf32>
    %22 = vector.extract_strided_slice %15 {offsets = [0, 64], sizes = [16, 64], strides = [1, 1]} : vector<16x128xf32> to vector<16x64xf32>
    %c0_23 = arith.constant 0 : index
    %c0_24 = arith.constant 0 : index
    %23 = vector.load %arg9[%c0_23, %c0_24] : memref<1x64xf32, #tpu.memory_space<vmem>>, vector<1x64xf32>
    %24 = vector.broadcast %23 : vector<1x64xf32> to vector<16x64xf32>
    %25 = arith.addf %22, %24 : vector<16x64xf32>
    %cst_25 = arith.constant 0.000000e+00 : f32
    %26 = vector.broadcast %cst_25 : f32 to vector<16x64xf32>
    %27 = arith.maximumf %25, %26 : vector<16x64xf32>
    %c0_26 = arith.constant 0 : index
    %c0_27 = arith.constant 0 : index
    %28 = vector.load %arg10[%c0_26, %c0_27] : memref<64x64xf32, #tpu.memory_space<vmem>>, vector<64x64xf32>
    %cst_28 = arith.constant dense<0.000000e+00> : vector<24x64xf32>
    %29 = tpu.matmul %21, %28, %cst_28 {dimension_numbers = #tpu.dot_dimension_numbers<[1], [0], [0], [1], [0, 0, 1, 1], [], []>} : vector<24x64xf32>, vector<64x64xf32>, vector<24x64xf32> -> vector<24x64xf32>
    %c0_29 = arith.constant 0 : index
    %c0_30 = arith.constant 0 : index
    %30 = vector.load %arg11[%c0_29, %c0_30] : memref<64x64xf32, #tpu.memory_space<vmem>>, vector<64x64xf32>
    %cst_31 = arith.constant dense<0.000000e+00> : vector<16x64xf32>
    %31 = tpu.matmul %27, %30, %cst_31 {dimension_numbers = #tpu.dot_dimension_numbers<[1], [0], [0], [1], [0, 0, 1, 1], [], []>} : vector<16x64xf32>, vector<64x64xf32>, vector<16x64xf32> -> vector<16x64xf32>
    %32 = tpu.concatenate %29, %31 in 0 : vector<24x64xf32>, vector<16x64xf32> -> vector<40x64xf32>
    %33 = arith.truncf %32 : vector<40x64xf32> to vector<40x64xbf16>
    %c0_32 = arith.constant 0 : index
    %c0_33 = arith.constant 0 : index
    %34 = vector.load %arg2[%c0_32, %c0_33] : memref<24x40xbf16, #tpu.memory_space<vmem>>, vector<24x40xbf16>
    %cst_34 = arith.constant dense<0.000000e+00> : vector<24x64xf32>
    %35 = tpu.matmul %34, %33, %cst_34 {dimension_numbers = #tpu.dot_dimension_numbers<[1], [0], [0], [1], [0, 0, 1, 1], [], []>} : vector<24x40xbf16>, vector<40x64xbf16>, vector<24x64xf32> -> vector<24x64xf32>
    %c0_35 = arith.constant 0 : index
    %c0_36 = arith.constant 0 : index
    %36 = vector.load %arg3[%c0_35, %c0_36] : memref<16x40xbf16, #tpu.memory_space<vmem>>, vector<16x40xbf16>
    %cst_37 = arith.constant dense<0.000000e+00> : vector<16x64xf32>
    %37 = tpu.matmul %36, %33, %cst_37 {dimension_numbers = #tpu.dot_dimension_numbers<[1], [0], [0], [1], [0, 0, 1, 1], [], []>} : vector<16x40xbf16>, vector<40x64xbf16>, vector<16x64xf32> -> vector<16x64xf32>
    %38 = vector.extract_strided_slice %35 {offsets = [0, 0], sizes = [24, 32], strides = [1, 1]} : vector<24x64xf32> to vector<24x32xf32>
    %c0_38 = arith.constant 0 : index
    %c0_39 = arith.constant 0 : index
    %39 = vector.load %arg12[%c0_38, %c0_39] : memref<1x32xf32, #tpu.memory_space<vmem>>, vector<1x32xf32>
    %40 = vector.broadcast %39 : vector<1x32xf32> to vector<24x32xf32>
    %41 = arith.addf %38, %40 : vector<24x32xf32>
    %cst_40 = arith.constant 0.000000e+00 : f32
    %42 = vector.broadcast %cst_40 : f32 to vector<24x32xf32>
    %43 = arith.maximumf %41, %42 : vector<24x32xf32>
    %44 = vector.extract_strided_slice %37 {offsets = [0, 32], sizes = [16, 32], strides = [1, 1]} : vector<16x64xf32> to vector<16x32xf32>
    %c0_41 = arith.constant 0 : index
    %c0_42 = arith.constant 0 : index
    %45 = vector.load %arg13[%c0_41, %c0_42] : memref<1x32xf32, #tpu.memory_space<vmem>>, vector<1x32xf32>
    %46 = vector.broadcast %45 : vector<1x32xf32> to vector<16x32xf32>
    %47 = arith.addf %44, %46 : vector<16x32xf32>
    %cst_43 = arith.constant 0.000000e+00 : f32
    %48 = vector.broadcast %cst_43 : f32 to vector<16x32xf32>
    %49 = arith.maximumf %47, %48 : vector<16x32xf32>
    %c0_44 = arith.constant 0 : index
    %c0_45 = arith.constant 0 : index
    %50 = vector.load %arg14[%c0_44, %c0_45] : memref<32x32xf32, #tpu.memory_space<vmem>>, vector<32x32xf32>
    %cst_46 = arith.constant dense<0.000000e+00> : vector<24x32xf32>
    %51 = tpu.matmul %43, %50, %cst_46 {dimension_numbers = #tpu.dot_dimension_numbers<[1], [0], [0], [1], [0, 0, 1, 1], [], []>} : vector<24x32xf32>, vector<32x32xf32>, vector<24x32xf32> -> vector<24x32xf32>
    %cst_47 = arith.constant dense<0.000000e+00> : vector<24x16xf32>
    %52 = tpu.matmul %51, %49, %cst_47 {dimension_numbers = #tpu.dot_dimension_numbers<[1], [1], [0], [0], [0, 0, 1, 0], [], []>} : vector<24x32xf32>, vector<16x32xf32>, vector<24x16xf32> -> vector<24x16xf32>
    %c0_48 = arith.constant 0 : index
    %c0_49 = arith.constant 0 : index
    %53 = vector.load %arg15[%c0_48, %c0_49] : memref<24x16xf32, #tpu.memory_space<vmem>>, vector<24x16xf32>
    tpu.vector_store %arg15[%c0_48, %c0_49], %52 {strides = array<i32>} : memref<24x16xf32, #tpu.memory_space<vmem>>, vector<24x16xf32>,
    return
  }
}

</mosaic_0001>

<llo_original>
// kernel: tpu_custom_call.1
$region0: #{tpu_custom_call.1}
  #allocation0 [shape = 'u32[]', space=smem, size = 0x4, offset = 0x4, fixed_abs, tag = 'smem constant byte address 0x4 - core index']
  #allocation1 [shape = 'u32[144,128]{1,0:T(1,128)}', space=vmem, size = 0x12000, scoped, tag = 'internal scratch']
  %s0 = inlined_call_operand.hbm [shape: f32[24,20], index: 0, kind: input, shape index: {}]
  %s1 = inlined_call_operand.hbm [shape: f32[16,12], index: 1, kind: input, shape index: {}]
  %s2 = inlined_call_operand.hbm [shape: bf16[24,40], index: 2, kind: input, shape index: {}]
  %s3 = inlined_call_operand.hbm [shape: bf16[16,40], index: 3, kind: input, shape index: {}]
  %s4 = inlined_call_operand.hbm [shape: f32[20,64], index: 4, kind: input, shape index: {}]
  %s5 = inlined_call_operand.vmem [shape: f32[12,64], index: 5, kind: input, shape index: {}]
  %s6 = inlined_call_operand.hbm [shape: f32[64,128], index: 6, kind: input, shape index: {}]
  %s7 = inlined_call_operand.hbm [shape: f32[64,128], index: 7, kind: input, shape index: {}]
  %s8 = inlined_call_operand.vmem [shape: f32[1,64], index: 8, kind: input, shape index: {}]
  %s9 = inlined_call_operand.vmem [shape: f32[1,64], index: 9, kind: input, shape index: {}]
  %s10 = inlined_call_operand.hbm [shape: f32[64,64], index: 10, kind: input, shape index: {}]
  %s11 = inlined_call_operand.hbm [shape: f32[64,64], index: 11, kind: input, shape index: {}]
  %s12 = inlined_call_operand.vmem [shape: f32[1,32], index: 12, kind: input, shape index: {}]
  %s13 = inlined_call_operand.vmem [shape: f32[1,32], index: 13, kind: input, shape index: {}]
  %s14 = inlined_call_operand.vmem [shape: f32[32,32], index: 14, kind: input, shape index: {}]
  %s15 = inlined_call_operand.vmem [shape: f32[24,16], index: 15, kind: output, shape index: {}]
  %s16 = sld [smem:[#allocation0]]
  $region106: #{tpu_custom_call.1} parent=0
    _
  %s18 = ssub.s32 1, %s16
  %s19 = scalar_select 0, %s18, %s16
  $region1: #{tpu_custom_call.1} parent=0
    #allocation2 [shape = 'u8[12288]{0}', space=vmem, size = 0x3000, scoped, tag = 'input window, operand 0, single buffered']
    #allocation3 [shape = 's32[1]{0}', space=sflag, size = 0x4, scoped, tag = 'scoped memory for tpu_custom_call.1']
    #allocation4 [shape = 'u8[8192]{0}', space=vmem, size = 0x2000, scoped, tag = 'input window, operand 1, single buffered']
    #allocation5 [shape = 's32[1]{0}', space=sflag, size = 0x4, scoped, tag = 'scoped memory for tpu_custom_call.1']
    #allocation6 [shape = 'u8[6144]{0}', space=vmem, size = 0x1800, scoped, tag = 'input window, operand 2, single buffered']
    #allocation7 [shape = 'u8[4096]{0}', space=vmem, size = 0x1000, scoped, tag = 'input window, operand 3, single buffered']
    #allocation8 [shape = 's32[1]{0}', space=sflag, size = 0x4, scoped, tag = 'scoped memory for tpu_custom_call.1']
    #allocation9 [shape = 'u8[12288]{0}', space=vmem, size = 0x3000, scoped, tag = 'input window, operand 4, single buffered']
    #allocation10 [shape = 'u8[32768]{0}', space=vmem, size = 0x8000, scoped, tag = 'input window, operand 6, single buffered']
    #allocation11 [shape = 's32[1]{0}', space=sflag, size = 0x4, scoped, tag = 'scoped memory for tpu_custom_call.1']
    #allocation12 [shape = 'u8[32768]{0}', space=vmem, size = 0x8000, scoped, tag = 'input window, operand 7, single buffered']
    #allocation13 [shape = 'u8[32768]{0}', space=vmem, size = 0x8000, scoped, tag = 'input window, operand 10, single buffered']
    #allocation14 [shape = 's32[1]{0}', space=sflag, size = 0x4, scoped, tag = 'scoped memory for tpu_custom_call.1']
    #allocation15 [shape = 'u8[32768]{0}', space=vmem, size = 0x8000, scoped, tag = 'input window, operand 11, single buffered']
    %20 = vsyncpa [#allocation3], 0
    %21 = vsyncpa [#allocation5], 0
    %22 = vsyncpa [#allocation8], 0
    %23 = vsyncpa [#allocation11], 0
    %24 = vsyncpa [#allocation14], 0
    // Predicated region
    $region2: #{tpu_custom_call.1} parent=1 // pred_check
      _
    $region3: #{tpu_custom_call.1} parent=1 // pred_check_branch
      %26 = sbr.rel (0) target = $region5
    $region4: #{tpu_custom_call.1} parent=1 // pred_region
      %s28 = ssub.s32 384, 384
      %29 = vsyncadd [#allocation3], %s28
      %s30 = sshll.u32 [#allocation2], 4
      %s31 = int_to_ptr.vmem [resolvable:$true] %s30
      %36 = dma.hbm_to_vmem [thread:$0]  %s0, 384, %s31, [#allocation3], 128, 128, 8
    $region5: #{tpu_custom_call.1} parent=1 // pred_fallthru
      _
    // Predicated region
    $region6: #{tpu_custom_call.1} parent=1 // pred_check
      _
    $region7: #{tpu_custom_call.1} parent=1 // pred_check_branch
      %38 = sbr.rel (0) target = $region9
    $region8: #{tpu_custom_call.1} parent=1 // pred_region
      %s40 = ssub.s32 256, 256
      %41 = vsyncadd [#allocation5], %s40
      %s42 = sshll.u32 [#allocation4], 4
      %s43 = int_to_ptr.vmem [resolvable:$true] %s42
      %48 = dma.hbm_to_vmem [thread:$0]  %s1, 256, %s43, [#allocation5], 128, 128, 8
    $region9: #{tpu_custom_call.1} parent=1 // pred_fallthru
      _
    // Predicated region
    $region10: #{tpu_custom_call.1} parent=1 // pred_check
      _
    $region11: #{tpu_custom_call.1} parent=1 // pred_check_branch
      %50 = sbr.rel (0) target = $region13
    $region12: #{tpu_custom_call.1} parent=1 // pred_region
      %s52 = ssub.s32 192, 192
      %53 = vsyncadd [#allocation5], %s52
      %s54 = sshll.u32 [#allocation6], 4
      %s55 = int_to_ptr.vmem [resolvable:$true] %s54
      %60 = dma.hbm_to_vmem [thread:$0]  %s2, 192, %s55, [#allocation5], 64, 64, 4
    $region13: #{tpu_custom_call.1} parent=1 // pred_fallthru
      _
    // Predicated region
    $region14: #{tpu_custom_call.1} parent=1 // pred_check
      _
    $region15: #{tpu_custom_call.1} parent=1 // pred_check_branch
      %62 = sbr.rel (0) target = $region17
    $region16: #{tpu_custom_call.1} parent=1 // pred_region
      %s64 = ssub.s32 128, 128
      %65 = vsyncadd [#allocation8], %s64
      %s66 = sshll.u32 [#allocation7], 4
      %s67 = int_to_ptr.vmem [resolvable:$true] %s66
      %72 = dma.hbm_to_vmem [thread:$0]  %s3, 128, %s67, [#allocation8], 64, 64, 4
    $region17: #{tpu_custom_call.1} parent=1 // pred_fallthru
      _
    // Predicated region
    $region18: #{tpu_custom_call.1} parent=1 // pred_check
      _
    $region19: #{tpu_custom_call.1} parent=1 // pred_check_branch
      %74 = sbr.rel (0) target = $region21
    $region20: #{tpu_custom_call.1} parent=1 // pred_region
      %s76 = ssub.s32 384, 384
      %77 = vsyncadd [#allocation8], %s76
      %s78 = sshll.u32 [#allocation9], 4
      %s79 = int_to_ptr.vmem [resolvable:$true] %s78
      %84 = dma.hbm_to_vmem [thread:$0]  %s4, 384, %s79, [#allocation8], 128, 128, 8
    $region21: #{tpu_custom_call.1} parent=1 // pred_fallthru
      _
    // Predicated region
    $region22: #{tpu_custom_call.1} parent=1 // pred_check
      _
    $region23: #{tpu_custom_call.1} parent=1 // pred_check_branch
      %86 = sbr.rel (0) target = $region25
    $region24: #{tpu_custom_call.1} parent=1 // pred_region
      _
    $region25: #{tpu_custom_call.1} parent=1 // pred_fallthru
      _
    // Predicated region
    $region26: #{tpu_custom_call.1} parent=1 // pred_check
      _
    $region27: #{tpu_custom_call.1} parent=1 // pred_check_branch
      %88 = sbr.rel (0) target = $region29
    $region28: #{tpu_custom_call.1} parent=1 // pred_region
      %s90 = ssub.s32 1024, 1024
      %91 = vsyncadd [#allocation11], %s90
      %s92 = sshll.u32 [#allocation10], 4
      %s93 = int_to_ptr.vmem [resolvable:$true] %s92
      %98 = dma.hbm_to_vmem [thread:$0]  %s6, 1024, %s93, [#allocation11], 128, 128, 8
    $region29: #{tpu_custom_call.1} parent=1 // pred_fallthru
      _
    // Predicated region
    $region30: #{tpu_custom_call.1} parent=1 // pred_check
      _
    $region31: #{tpu_custom_call.1} parent=1 // pred_check_branch
      %100 = sbr.rel (0) target = $region33
    $region32: #{tpu_custom_call.1} parent=1 // pred_region
      %s102 = ssub.s32 1024, 1024
      %103 = vsyncadd [#allocation11], %s102
      %s104 = sshll.u32 [#allocation12], 4
      %s105 = int_to_ptr.vmem [resolvable:$true] %s104
      %110 = dma.hbm_to_vmem [thread:$0]  %s7, 1024, %s105, [#allocation11], 128, 128, 8
    $region33: #{tpu_custom_call.1} parent=1 // pred_fallthru
      _
    // Predicated region
    $region34: #{tpu_custom_call.1} parent=1 // pred_check
      _
    $region35: #{tpu_custom_call.1} parent=1 // pred_check_branch
      %112 = sbr.rel (0) target = $region37
    $region36: #{tpu_custom_call.1} parent=1 // pred_region
      _
    $region37: #{tpu_custom_call.1} parent=1 // pred_fallthru
      _
    // Predicated region
    $region38: #{tpu_custom_call.1} parent=1 // pred_check
      _
    $region39: #{tpu_custom_call.1} parent=1 // pred_check_branch
      %114 = sbr.rel (0) target = $region41
    $region40: #{tpu_custom_call.1} parent=1 // pred_region
      _
    $region41: #{tpu_custom_call.1} parent=1 // pred_fallthru
      _
    // Predicated region
    $region42: #{tpu_custom_call.1} parent=1 // pred_check
      _
    $region43: #{tpu_custom_call.1} parent=1 // pred_check_branch
      %116 = sbr.rel (0) target = $region45
    $region44: #{tpu_custom_call.1} parent=1 // pred_region
      %s118 = ssub.s32 1024, 1024
      %119 = vsyncadd [#allocation14], %s118
      %s120 = sshll.u32 [#allocation13], 4
      %s121 = int_to_ptr.vmem [resolvable:$true] %s120
      %126 = dma.hbm_to_vmem [thread:$0]  %s10, 1024, %s121, [#allocation14], 128, 128, 8
    $region45: #{tpu_custom_call.1} parent=1 // pred_fallthru
      _
    // Predicated region
    $region46: #{tpu_custom_call.1} parent=1 // pred_check
      _
    $region47: #{tpu_custom_call.1} parent=1 // pred_check_branch
      %128 = sbr.rel (0) target = $region49
    $region48: #{tpu_custom_call.1} parent=1 // pred_region
      %s130 = ssub.s32 1024, 1024
      %131 = vsyncadd [#allocation14], %s130
      %s132 = sshll.u32 [#allocation15], 4
      %s133 = int_to_ptr.vmem [resolvable:$true] %s132
      %138 = dma.hbm_to_vmem [thread:$0]  %s11, 1024, %s133, [#allocation14], 128, 128, 8
    $region49: #{tpu_custom_call.1} parent=1 // pred_fallthru
      _
    // Predicated region
    $region50: #{tpu_custom_call.1} parent=1 // pred_check
      _
    $region51: #{tpu_custom_call.1} parent=1 // pred_check_branch
      %140 = sbr.rel (0) target = $region53
    $region52: #{tpu_custom_call.1} parent=1 // pred_region
      _
    $region53: #{tpu_custom_call.1} parent=1 // pred_fallthru
      _
    // Predicated region
    $region54: #{tpu_custom_call.1} parent=1 // pred_check
      _
    $region55: #{tpu_custom_call.1} parent=1 // pred_check_branch
      %142 = sbr.rel (0) target = $region57
    $region56: #{tpu_custom_call.1} parent=1 // pred_region
      _
    $region57: #{tpu_custom_call.1} parent=1 // pred_fallthru
      _
    // Predicated region
    $region58: #{tpu_custom_call.1} parent=1 // pred_check
      _
    $region59: #{tpu_custom_call.1} parent=1 // pred_check_branch
      %144 = sbr.rel (0) target = $region61
    $region60: #{tpu_custom_call.1} parent=1 // pred_region
      _
    $region61: #{tpu_custom_call.1} parent=1 // pred_fallthru
      _
    // Predicated region
    $region62: #{tpu_custom_call.1} parent=1 // pred_check
      _
    $region63: #{tpu_custom_call.1} parent=1 // pred_check_branch
      %146 = sbr.rel (0) target = $region65
    $region64: #{tpu_custom_call.1} parent=1 // pred_region
      %147 = dma.done [#allocation3], 384
    $region65: #{tpu_custom_call.1} parent=1 // pred_fallthru
      _
    // Predicated region
    $region66: #{tpu_custom_call.1} parent=1 // pred_check
      _
    $region67: #{tpu_custom_call.1} parent=1 // pred_check_branch
      %149 = sbr.rel (0) target = $region69
    $region68: #{tpu_custom_call.1} parent=1 // pred_region
      %150 = dma.done [#allocation5], 256
    $region69: #{tpu_custom_call.1} parent=1 // pred_fallthru
      _
    // Predicated region
    $region70: #{tpu_custom_call.1} parent=1 // pred_check
      _
    $region71: #{tpu_custom_call.1} parent=1 // pred_check_branch
      %152 = sbr.rel (0) target = $region73
    $region72: #{tpu_custom_call.1} parent=1 // pred_region
      %153 = dma.done [#allocation5], 192
    $region73: #{tpu_custom_call.1} parent=1 // pred_fallthru
      _
    // Predicated region
    $region74: #{tpu_custom_call.1} parent=1 // pred_check
      _
    $region75: #{tpu_custom_call.1} parent=1 // pred_check_branch
      %155 = sbr.rel (0) target = $region77
    $region76: #{tpu_custom_call.1} parent=1 // pred_region
      %156 = dma.done [#allocation8], 128
    $region77: #{tpu_custom_call.1} parent=1 // pred_fallthru
      _
    // Predicated region
    $region78: #{tpu_custom_call.1} parent=1 // pred_check
      _
    $region79: #{tpu_custom_call.1} parent=1 // pred_check_branch
      %158 = sbr.rel (0) target = $region81
    $region80: #{tpu_custom_call.1} parent=1 // pred_region
      %159 = dma.done [#allocation8], 384
    $region81: #{tpu_custom_call.1} parent=1 // pred_fallthru
      _
    // Predicated region
    $region82: #{tpu_custom_call.1} parent=1 // pred_check
      _
    $region83: #{tpu_custom_call.1} parent=1 // pred_check_branch
      %161 = sbr.rel (0) target = $region85
    $region84: #{tpu_custom_call.1} parent=1 // pred_region
      %162 = dma.done [#allocation11], 1024
    $region85: #{tpu_custom_call.1} parent=1 // pred_fallthru
      _
    // Predicated region
    $region86: #{tpu_custom_call.1} parent=1 // pred_check
      _
    $region87: #{tpu_custom_call.1} parent=1 // pred_check_branch
      %164 = sbr.rel (0) target = $region89
    $region88: #{tpu_custom_call.1} parent=1 // pred_region
      %165 = dma.done [#allocation11], 1024
    $region89: #{tpu_custom_call.1} parent=1 // pred_fallthru
      _
    // Predicated region
    $region90: #{tpu_custom_call.1} parent=1 // pred_check
      _
    $region91: #{tpu_custom_call.1} parent=1 // pred_check_branch
      %167 = sbr.rel (0) target = $region93
    $region92: #{tpu_custom_call.1} parent=1 // pred_region
      %168 = dma.done [#allocation14], 1024
    $region93: #{tpu_custom_call.1} parent=1 // pred_fallthru
      _
    // Predicated region
    $region94: #{tpu_custom_call.1} parent=1 // pred_check
      _
    $region95: #{tpu_custom_call.1} parent=1 // pred_check_branch
      %170 = sbr.rel (0) target = $region97
    $region96: #{tpu_custom_call.1} parent=1 // pred_region
      %171 = dma.done [#allocation14], 1024
    $region97: #{tpu_custom_call.1} parent=1 // pred_fallthru
      _
    %v173 = vld [vmem:[#allocation2] sm:$0xff]
    %v174 = vld [vmem:[#allocation2 + $0x8] sm:$0xff]
    %v175 = vld [vmem:[#allocation2 + $0x10] sm:$0xff]
    %v176 = vld [vmem:[#allocation9] sm:$0xff]
    %v177 = vld [vmem:[#allocation9 + $0x8] sm:$0xff]
    %v178 = vld [vmem:[#allocation9 + $0x10] sm:$0xf]
    %vm179 = vcmask 162816
    %v181 = vsel %vm179, %v173, 0
    %v184 = vsel %vm179, %v174, 0
    %v187 = vsel %vm179, %v175, 0
    %vm189 = vcmask 1043456
    %v191 = vsel %vm189, %v178, 0
    %193 = vmatprep.subr.mxu0 0.0
    %194 = vmatpush1.msra.mxu0 %v176
    %195 = vmatprep.subr.mxu0 0.0
    %196 = vmatpush1.msra.mxu0 %v177
    %197 = vmatprep.subr.mxu0 0.0
    %198 = vmatpush1.msra.mxu0 %v191
    %199 = vmatprep.subr.mxu0 0.0
    %200 = vmatpush1.msra.mxu0 0.0
    %201 = vmatprep.subr.mxu0 0.0
    %202 = vmatpush1.msra.mxu0 0.0
    %203 = vmatprep.subr.mxu0 0.0
    %204 = vmatpush1.msra.mxu0 0.0
    %205 = vmatprep.subr.mxu0 0.0
    %206 = vmatpush1.msra.mxu0 0.0
    %207 = vmatprep.subr.mxu0 0.0
    %208 = vmatpush1.msra.mxu0 0.0
    %209 = vmatprep.subr.mxu0 0.0
    %210 = vmatpush1.msra.mxu0 0.0
    %211 = vmatprep.subr.mxu0 0.0
    %212 = vmatpush1.msra.mxu0 0.0
    %213 = vmatprep.subr.mxu0 0.0
    %214 = vmatpush1.msra.mxu0 0.0
    %215 = vmatprep.subr.mxu0 0.0
    %216 = vmatpush1.msra.mxu0 0.0
    %217 = vmatprep.subr.mxu0 0.0
    %218 = vmatpush1.msra.mxu0 0.0
    %219 = vmatprep.subr.mxu0 0.0
    %220 = vmatpush1.msra.mxu0 0.0
    %221 = vmatprep.subr.mxu0 0.0
    %222 = vmatpush1.msra.mxu0 0.0
    %223 = vmatprep.subr.mxu0 0.0
    %224 = vmatpush1.msra.mxu0 0.0
    %225 = vmatprep.subr.mxu0 0.0
    %226 = vmatpush1.msra.mxu0 0.0
    %227 = vmatprep.subr.mxu0 0.0
    %228 = vmatpush1.msra.mxu0 0.0
    %229 = vmatprep.subr.mxu0 0.0
    %230 = vmatpush1.msra.mxu0 0.0
    %231 = vmatprep.subr.mxu0 0.0
    %232 = vmatpush1.msra.mxu0 0.0
    %233 = vmatprep.subr.mxu0 0.0
    %234 = vmatpush1.msra.mxu0 0.0
    %235 = vmatprep.subr.mxu0 0.0
    %236 = vmatpush1.msra.mxu0 0.0
    %237 = vmatprep.subr.mxu0 0.0
    %238 = vmatpush1.msra.mxu0 0.0
    %239 = vmatprep.subr.mxu0 0.0
    %240 = vmatpush1.msra.mxu0 0.0
    %241 = vmatprep.subr.mxu0 0.0
    %242 = vmatpush1.msra.mxu0 0.0
    %243 = vmatprep.subr.mxu0 0.0
    %244 = vmatpush1.msra.mxu0 0.0
    %245 = vmatprep.subr.mxu0 0.0
    %246 = vmatpush1.msra.mxu0 0.0
    %247 = vmatprep.subr.mxu0 0.0
    %248 = vmatpush1.msra.mxu0 0.0
    %249 = vmatprep.subr.mxu0 0.0
    %250 = vmatpush1.msra.mxu0 0.0
    %251 = vmatprep.subr.mxu0 0.0
    %252 = vmatpush1.msra.mxu0 0.0
    %253 = vmatprep.subr.mxu0 0.0
    %254 = vmatpush1.msra.mxu0 0.0
    %255 = vmatprep.subr.mxu0 0.0
    %256 = vmatpush1.msra.mxu0 0.0
    %257 = vmatprep.mubr.f32.mxu0 0.0
    %258 = vmatmul.mubr.f32.gmra.mrb[0].mxu0 %v181
    %v259 = vpop.f32.mrb[0].mxu0
    %v260 = vadd.f32 0.0, %v259
    %v261 = vpop.f32.mrb[0].mxu0
    %262 = vmatprep.mubr.f32.mxu0 0.0
    %263 = vmatmul.mubr.f32.gmra.mrb[0].mxu0 %v184
    %v264 = vpop.f32.mrb[0].mxu0
    %v265 = vadd.f32 0.0, %v264
    %v266 = vpop.f32.mrb[0].mxu0
    %267 = vmatprep.mubr.f32.mxu0 0.0
    %268 = vmatmul.mubr.f32.gmra.mrb[0].mxu0 %v187
    %v269 = vpop.f32.mrb[0].mxu0
    %v270 = vadd.f32 0.0, %v269
    %v271 = vpop.f32.mrb[0].mxu0
    %272 = vdwg.mxu0
    %v273 = vld [vmem:[#allocation4] sm:$0xff]
    %v274 = vld [vmem:[#allocation4 + $0x8] sm:$0xff]
    %v275 = vld [vmem:[%s5] sm:$0xff]
    %v276 = vld [vmem:[%s5 + $0x8] sm:$0xf]
    %vm277 = vcmask 97280
    %v279 = vsel %vm277, %v273, 0
    %v282 = vsel %vm277, %v274, 0
    %v285 = vsel %vm189, %v276, 0
    %287 = vmatprep.subr.mxu0 0.0
    %288 = vmatpush1.msra.mxu0 %v275
    %289 = vmatprep.subr.mxu0 0.0
    %290 = vmatpush1.msra.mxu0 %v285
    %291 = vmatprep.subr.mxu0 0.0
    %292 = vmatpush1.msra.mxu0 0.0
    %293 = vmatprep.subr.mxu0 0.0
    %294 = vmatpush1.msra.mxu0 0.0
    %295 = vmatprep.subr.mxu0 0.0
    %296 = vmatpush1.msra.mxu0 0.0
    %297 = vmatprep.subr.mxu0 0.0
    %298 = vmatpush1.msra.mxu0 0.0
    %299 = vmatprep.subr.mxu0 0.0
    %300 = vmatpush1.msra.mxu0 0.0
    %301 = vmatprep.subr.mxu0 0.0
    %302 = vmatpush1.msra.mxu0 0.0
    %303 = vmatprep.subr.mxu0 0.0
    %304 = vmatpush1.msra.mxu0 0.0
    %305 = vmatprep.subr.mxu0 0.0
    %306 = vmatpush1.msra.mxu0 0.0
    %307 = vmatprep.subr.mxu0 0.0
    %308 = vmatpush1.msra.mxu0 0.0
    %309 = vmatprep.subr.mxu0 0.0
    %310 = vmatpush1.msra.mxu0 0.0
    %311 = vmatprep.subr.mxu0 0.0
    %312 = vmatpush1.msra.mxu0 0.0
    %313 = vmatprep.subr.mxu0 0.0
    %314 = vmatpush1.msra.mxu0 0.0
    %315 = vmatprep.subr.mxu0 0.0
    %316 = vmatpush1.msra.mxu0 0.0
    %317 = vmatprep.subr.mxu0 0.0
    %318 = vmatpush1.msra.mxu0 0.0
    %319 = vmatprep.subr.mxu0 0.0
    %320 = vmatpush1.msra.mxu0 0.0
    %321 = vmatprep.subr.mxu0 0.0
    %322 = vmatpush1.msra.mxu0 0.0
    %323 = vmatprep.subr.mxu0 0.0
    %324 = vmatpush1.msra.mxu0 0.0
    %325 = vmatprep.subr.mxu0 0.0
    %326 = vmatpush1.msra.mxu0 0.0
    %327 = vmatprep.subr.mxu0 0.0
    %328 = vmatpush1.msra.mxu0 0.0
    %329 = vmatprep.subr.mxu0 0.0
    %330 = vmatpush1.msra.mxu0 0.0
    %331 = vmatprep.subr.mxu0 0.0
    %332 = vmatpush1.msra.mxu0 0.0
    %333 = vmatprep.subr.mxu0 0.0
    %334 = vmatpush1.msra.mxu0 0.0
    %335 = vmatprep.subr.mxu0 0.0
    %336 = vmatpush1.msra.mxu0 0.0
    %337 = vmatprep.subr.mxu0 0.0
    %338 = vmatpush1.msra.mxu0 0.0
    %339 = vmatprep.subr.mxu0 0.0
    %340 = vmatpush1.msra.mxu0 0.0
    %341 = vmatprep.subr.mxu0 0.0
    %342 = vmatpush1.msra.mxu0 0.0
    %343 = vmatprep.subr.mxu0 0.0
    %344 = vmatpush1.msra.mxu0 0.0
    %345 = vmatprep.subr.mxu0 0.0
    %346 = vmatpush1.msra.mxu0 0.0
    %347 = vmatprep.subr.mxu0 0.0
    %348 = vmatpush1.msra.mxu0 0.0
    %349 = vmatprep.subr.mxu0 0.0
    %350 = vmatpush1.msra.mxu0 0.0
    %351 = vmatprep.mubr.f32.mxu0 0.0
    %352 = vmatmul.mubr.f32.gmra.mrb[0].mxu0 %v279
    %v353 = vpop.f32.mrb[0].mxu0
    %v354 = vadd.f32 0.0, %v353
    %v355 = vpop.f32.mrb[0].mxu0
    %356 = vmatprep.mubr.f32.mxu0 0.0
    %357 = vmatmul.mubr.f32.gmra.mrb[0].mxu0 %v282
    %v358 = vpop.f32.mrb[0].mxu0
    %v359 = vadd.f32 0.0, %v358
    %v360 = vpop.f32.mrb[0].mxu0
    %361 = vdwg.mxu0
    %v362 = vld [vmem:[#allocation10] sm:$0xff]
    %v363 = vld [vmem:[#allocation10 + $0x8] sm:$0xff]
    %v364 = vld [vmem:[#allocation10 + $0x10] sm:$0xff]
    %v365 = vld [vmem:[#allocation10 + $0x18] sm:$0xff]
    %v366 = vld [vmem:[#allocation10 + $0x20] sm:$0xff]
    %v367 = vld [vmem:[#allocation10 + $0x28] sm:$0xff]
    %v368 = vld [vmem:[#allocation10 + $0x30] sm:$0xff]
    %v369 = vld [vmem:[#allocation10 + $0x38] sm:$0xff]
    %vm370 = vcmask 523264
    %v372 = vsel %vm370, %v260, 0
    %v375 = vsel %vm370, %v265, 0
    %v378 = vsel %vm370, %v270, 0
    %380 = vmatprep.subr.mxu0 0.0
    %381 = vmatpush1.msra.mxu0 %v362
    %382 = vmatprep.subr.mxu0 0.0
    %383 = vmatpush1.msra.mxu0 %v363
    %384 = vmatprep.subr.mxu0 0.0
    %385 = vmatpush1.msra.mxu0 %v364
    %386 = vmatprep.subr.mxu0 0.0
    %387 = vmatpush1.msra.mxu0 %v365
    %388 = vmatprep.subr.mxu0 0.0
    %389 = vmatpush1.msra.mxu0 %v366
    %390 = vmatprep.subr.mxu0 0.0
    %391 = vmatpush1.msra.mxu0 %v367
    %392 = vmatprep.subr.mxu0 0.0
    %393 = vmatpush1.msra.mxu0 %v368
    %394 = vmatprep.subr.mxu0 0.0
    %395 = vmatpush1.msra.mxu0 %v369
    %396 = vmatprep.subr.mxu0 0.0
    %397 = vmatpush1.msra.mxu0 0.0
    %398 = vmatprep.subr.mxu0 0.0
    %399 = vmatpush1.msra.mxu0 0.0
    %400 = vmatprep.subr.mxu0 0.0
    %401 = vmatpush1.msra.mxu0 0.0
    %402 = vmatprep.subr.mxu0 0.0
    %403 = vmatpush1.msra.mxu0 0.0
    %404 = vmatprep.subr.mxu0 0.0
    %405 = vmatpush1.msra.mxu0 0.0
    %406 = vmatprep.subr.mxu0 0.0
    %407 = vmatpush1.msra.mxu0 0.0
    %408 = vmatprep.subr.mxu0 0.0
    %409 = vmatpush1.msra.mxu0 0.0
    %410 = vmatprep.subr.mxu0 0.0
    %411 = vmatpush1.msra.mxu0 0.0
    %412 = vmatprep.subr.mxu0 0.0
    %413 = vmatpush1.msra.mxu0 0.0
    %414 = vmatprep.subr.mxu0 0.0
    %415 = vmatpush1.msra.mxu0 0.0
    %416 = vmatprep.subr.mxu0 0.0
    %417 = vmatpush1.msra.mxu0 0.0
    %418 = vmatprep.subr.mxu0 0.0
    %419 = vmatpush1.msra.mxu0 0.0
    %420 = vmatprep.subr.mxu0 0.0
    %421 = vmatpush1.msra.mxu0 0.0
    %422 = vmatprep.subr.mxu0 0.0
    %423 = vmatpush1.msra.mxu0 0.0
    %424 = vmatprep.subr.mxu0 0.0
    %425 = vmatpush1.msra.mxu0 0.0
    %426 = vmatprep.subr.mxu0 0.0
    %427 = vmatpush1.msra.mxu0 0.0
    %428 = vmatprep.subr.mxu0 0.0
    %429 = vmatpush1.msra.mxu0 0.0
    %430 = vmatprep.subr.mxu0 0.0
    %431 = vmatpush1.msra.mxu0 0.0
    %432 = vmatprep.subr.mxu0 0.0
    %433 = vmatpush1.msra.mxu0 0.0
    %434 = vmatprep.subr.mxu0 0.0
    %435 = vmatpush1.msra.mxu0 0.0
    %436 = vmatprep.subr.mxu0 0.0
    %437 = vmatpush1.msra.mxu0 0.0
    %438 = vmatprep.subr.mxu0 0.0
    %439 = vmatpush1.msra.mxu0 0.0
    %440 = vmatprep.subr.mxu0 0.0
    %441 = vmatpush1.msra.mxu0 0.0
    %442 = vmatprep.subr.mxu0 0.0
    %443 = vmatpush1.msra.mxu0 0.0
    %444 = vmatprep.mubr.f32.mxu0 0.0
    %445 = vmatmul.mubr.f32.gmra.mrb[0].mxu0 %v372
    %v446 = vpop.f32.mrb[0].mxu0
    %v447 = vadd.f32 0.0, %v446
    %v448 = vpop.f32.mrb[0].mxu0
    %449 = vmatprep.mubr.f32.mxu0 0.0
    %450 = vmatmul.mubr.f32.gmra.mrb[0].mxu0 %v375
    %v451 = vpop.f32.mrb[0].mxu0
    %v452 = vadd.f32 0.0, %v451
    %v453 = vpop.f32.mrb[0].mxu0
    %454 = vmatprep.mubr.f32.mxu0 0.0
    %455 = vmatmul.mubr.f32.gmra.mrb[0].mxu0 %v378
    %v456 = vpop.f32.mrb[0].mxu0
    %v457 = vadd.f32 0.0, %v456
    %v458 = vpop.f32.mrb[0].mxu0
    %459 = vdwg.mxu0
    %v460 = vld [vmem:[#allocation12] sm:$0xff]
    %v461 = vld [vmem:[#allocation12 + $0x8] sm:$0xff]
    %v462 = vld [vmem:[#allocation12 + $0x10] sm:$0xff]
    %v463 = vld [vmem:[#allocation12 + $0x18] sm:$0xff]
    %v464 = vld [vmem:[#allocation12 + $0x20] sm:$0xff]
    %v465 = vld [vmem:[#allocation12 + $0x28] sm:$0xff]
    %v466 = vld [vmem:[#allocation12 + $0x30] sm:$0xff]
    %v467 = vld [vmem:[#allocation12 + $0x38] sm:$0xff]
    %v469 = vsel %vm370, %v354, 0
    %v472 = vsel %vm370, %v359, 0
    %474 = vmatprep.subr.mxu0 0.0
    %475 = vmatpush1.msra.mxu0 %v460
    %476 = vmatprep.subr.mxu0 0.0
    %477 = vmatpush1.msra.mxu0 %v461
    %478 = vmatprep.subr.mxu0 0.0
    %479 = vmatpush1.msra.mxu0 %v462
    %480 = vmatprep.subr.mxu0 0.0
    %481 = vmatpush1.msra.mxu0 %v463
    %482 = vmatprep.subr.mxu0 0.0
    %483 = vmatpush1.msra.mxu0 %v464
    %484 = vmatprep.subr.mxu0 0.0
    %485 = vmatpush1.msra.mxu0 %v465
    %486 = vmatprep.subr.mxu0 0.0
    %487 = vmatpush1.msra.mxu0 %v466
    %488 = vmatprep.subr.mxu0 0.0
    %489 = vmatpush1.msra.mxu0 %v467
    %490 = vmatprep.subr.mxu0 0.0
    %491 = vmatpush1.msra.mxu0 0.0
    %492 = vmatprep.subr.mxu0 0.0
    %493 = vmatpush1.msra.mxu0 0.0
    %494 = vmatprep.subr.mxu0 0.0
    %495 = vmatpush1.msra.mxu0 0.0
    %496 = vmatprep.subr.mxu0 0.0
    %497 = vmatpush1.msra.mxu0 0.0
    %498 = vmatprep.subr.mxu0 0.0
    %499 = vmatpush1.msra.mxu0 0.0
    %500 = vmatprep.subr.mxu0 0.0
    %501 = vmatpush1.msra.mxu0 0.0
    %502 = vmatprep.subr.mxu0 0.0
    %503 = vmatpush1.msra.mxu0 0.0
    %504 = vmatprep.subr.mxu0 0.0
    %505 = vmatpush1.msra.mxu0 0.0
    %506 = vmatprep.subr.mxu0 0.0
    %507 = vmatpush1.msra.mxu0 0.0
    %508 = vmatprep.subr.mxu0 0.0
    %509 = vmatpush1.msra.mxu0 0.0
    %510 = vmatprep.subr.mxu0 0.0
    %511 = vmatpush1.msra.mxu0 0.0
    %512 = vmatprep.subr.mxu0 0.0
    %513 = vmatpush1.msra.mxu0 0.0
    %514 = vmatprep.subr.mxu0 0.0
    %515 = vmatpush1.msra.mxu0 0.0
    %516 = vmatprep.subr.mxu0 0.0
    %517 = vmatpush1.msra.mxu0 0.0
    %518 = vmatprep.subr.mxu0 0.0
    %519 = vmatpush1.msra.mxu0 0.0
    %520 = vmatprep.subr.mxu0 0.0
    %521 = vmatpush1.msra.mxu0 0.0
    %522 = vmatprep.subr.mxu0 0.0
    %523 = vmatpush1.msra.mxu0 0.0
    %524 = vmatprep.subr.mxu0 0.0
    %525 = vmatpush1.msra.mxu0 0.0
    %526 = vmatprep.subr.mxu0 0.0
    %527 = vmatpush1.msra.mxu0 0.0
    %528 = vmatprep.subr.mxu0 0.0
    %529 = vmatpush1.msra.mxu0 0.0
    %530 = vmatprep.subr.mxu0 0.0
    %531 = vmatpush1.msra.mxu0 0.0
    %532 = vmatprep.subr.mxu0 0.0
    %533 = vmatpush1.msra.mxu0 0.0
    %534 = vmatprep.subr.mxu0 0.0
    %535 = vmatpush1.msra.mxu0 0.0
    %536 = vmatprep.subr.mxu0 0.0
    %537 = vmatpush1.msra.mxu0 0.0
    %538 = vmatprep.mubr.f32.mxu0 0.0
    %539 = vmatmul.mubr.f32.gmra.mrb[0].mxu0 %v469
    %v540 = vpop.f32.mrb[0].mxu0
    %v541 = vadd.f32 0.0, %v540
    %v542 = vpop.f32.mrb[0].mxu0
    %543 = vmatprep.mubr.f32.mxu0 0.0
    %544 = vmatmul.mubr.f32.gmra.mrb[0].mxu0 %v472
    %v545 = vpop.f32.mrb[0].mxu0
    %v546 = vadd.f32 0.0, %v545
    %v547 = vpop.f32.mrb[0].mxu0
    %548 = vdwg.mxu0
    %v549 = vpack.c.bf16 %v452, %v447
    %v550 = vpack.c.bf16 %v541, %v457
    %v551 = vpack.c.bf16 %v546, %v546
    %v552 = vld [vmem:[#allocation6] sm:$0xf]
    %v553 = vld [vmem:[#allocation6 + $0x4] sm:$0xf]
    %v554 = vld [vmem:[#allocation6 + $0x8] sm:$0xf]
    %v558 = vunpack.c.l.b16 %v552
    %v559 = vunpack.c.l.b16 %v553
    %v560 = vunpack.c.l.b16 %v554
    %v561 = vpack.c.b16 %v559, %v558
    %v562 = vpack.c.b16 %v560, %v560
    %vm563 = vcmask 326656
    %v565 = vsel %vm563, %v561, 0
    %v568 = vsel %vm563, %v562, 0
    %v571 = vsel %vm189, %v551, 0
    %573 = vmatprep.subr.bf16.mxu0 0
    %574 = vmatpush1.bf16.msra.mxu0 %v549
    %575 = vmatprep.subr.bf16.mxu0 0
    %576 = vmatpush1.bf16.msra.mxu0 %v550
    %577 = vmatprep.subr.bf16.mxu0 0
    %578 = vmatpush1.bf16.msra.mxu0 %v571
    %579 = vmatprep.subr.bf16.mxu0 0
    %580 = vmatpush1.bf16.msra.mxu0 0
    %581 = vmatprep.subr.bf16.mxu0 0
    %582 = vmatpush1.bf16.msra.mxu0 0
    %583 = vmatprep.subr.bf16.mxu0 0
    %584 = vmatpush1.bf16.msra.mxu0 0
    %585 = vmatprep.subr.bf16.mxu0 0
    %586 = vmatpush1.bf16.msra.mxu0 0
    %587 = vmatprep.subr.bf16.mxu0 0
    %588 = vmatpush1.bf16.msra.mxu0 0
    %589 = vmatprep.subr.bf16.mxu0 0
    %590 = vmatpush1.bf16.msra.mxu0 0
    %591 = vmatprep.subr.bf16.mxu0 0
    %592 = vmatpush1.bf16.msra.mxu0 0
    %593 = vmatprep.subr.bf16.mxu0 0
    %594 = vmatpush1.bf16.msra.mxu0 0
    %595 = vmatprep.subr.bf16.mxu0 0
    %596 = vmatpush1.bf16.msra.mxu0 0
    %597 = vmatprep.subr.bf16.mxu0 0
    %598 = vmatpush1.bf16.msra.mxu0 0
    %599 = vmatprep.subr.bf16.mxu0 0
    %600 = vmatpush1.bf16.msra.mxu0 0
    %601 = vmatprep.subr.bf16.mxu0 0
    %602 = vmatpush1.bf16.msra.mxu0 0
    %603 = vmatprep.subr.bf16.mxu0 0
    %604 = vmatpush1.bf16.msra.mxu0 0
    %605 = vmatprep.mubr.bf16.mxu0 0
    %606 = vmatmul.mubr.bf16.gmra.mrb[0].mxu0 %v565
    %v607 = vpop.f32.mrb[0].mxu0
    %v608 = vadd.f32 0.0, %v607
    %v609 = vpop.f32.mrb[0].mxu0
    %v610 = vpop.f32.mrb[0].mxu0
    %v611 = vadd.f32 0.0, %v610
    %v612 = vpop.f32.mrb[0].mxu0
    %613 = vmatprep.mubr.bf16.mxu0 0
    %614 = vmatmul.mubr.bf16.gmra.mrb[0].mxu0 %v568
    %v615 = vpop.f32.mrb[0].mxu0
    %v616 = vadd.f32 0.0, %v615
    %v617 = vpop.f32.mrb[0].mxu0
    %v618 = vpop.f32.mrb[0].mxu0
    %v619 = vpop.f32.mrb[0].mxu0
    %620 = vdwg.mxu0
    %v621 = vld [vmem:[#allocation7] sm:$0xf]
    %v622 = vld [vmem:[#allocation7 + $0x4] sm:$0xf]
    %v625 = vunpack.c.l.b16 %v621
    %v626 = vunpack.c.l.b16 %v622
    %v627 = vpack.c.b16 %v626, %v625
    %v629 = vsel %vm563, %v627, 0
    %631 = vmatprep.subr.bf16.mxu0 0
    %632 = vmatpush1.bf16.msra.mxu0 %v549
    %633 = vmatprep.subr.bf16.mxu0 0
    %634 = vmatpush1.bf16.msra.mxu0 %v550
    %635 = vmatprep.subr.bf16.mxu0 0
    %636 = vmatpush1.bf16.msra.mxu0 %v571
    %637 = vmatprep.subr.bf16.mxu0 0
    %638 = vmatpush1.bf16.msra.mxu0 0
    %639 = vmatprep.subr.bf16.mxu0 0
    %640 = vmatpush1.bf16.msra.mxu0 0
    %641 = vmatprep.subr.bf16.mxu0 0
    %642 = vmatpush1.bf16.msra.mxu0 0
    %643 = vmatprep.subr.bf16.mxu0 0
    %644 = vmatpush1.bf16.msra.mxu0 0
    %645 = vmatprep.subr.bf16.mxu0 0
    %646 = vmatpush1.bf16.msra.mxu0 0
    %647 = vmatprep.subr.bf16.mxu0 0
    %648 = vmatpush1.bf16.msra.mxu0 0
    %649 = vmatprep.subr.bf16.mxu0 0
    %650 = vmatpush1.bf16.msra.mxu0 0
    %651 = vmatprep.subr.bf16.mxu0 0
    %652 = vmatpush1.bf16.msra.mxu0 0
    %653 = vmatprep.subr.bf16.mxu0 0
    %654 = vmatpush1.bf16.msra.mxu0 0
    %655 = vmatprep.subr.bf16.mxu0 0
    %656 = vmatpush1.bf16.msra.mxu0 0
    %657 = vmatprep.subr.bf16.mxu0 0
    %658 = vmatpush1.bf16.msra.mxu0 0
    %659 = vmatprep.subr.bf16.mxu0 0
    %660 = vmatpush1.bf16.msra.mxu0 0
    %661 = vmatprep.subr.bf16.mxu0 0
    %662 = vmatpush1.bf16.msra.mxu0 0
    %663 = vmatprep.mubr.bf16.mxu0 0
    %664 = vmatmul.mubr.bf16.gmra.mrb[0].mxu0 %v629
    %v665 = vpop.f32.mrb[0].mxu0
    %v666 = vadd.f32 0.0, %v665
    %v667 = vpop.f32.mrb[0].mxu0
    %v668 = vpop.f32.mrb[0].mxu0
    %v669 = vadd.f32 0.0, %v668
    %v670 = vpop.f32.mrb[0].mxu0
    %671 = vdwg.mxu0
    %v672 = vld [vmem:[%s8] sm:$0x1]
    %v674 = vlaneseq
    %v675 = vshrl.u32 %v674, 7
    %v676 = vsub.s32 0, %v675
    %v677 = vrot.slane %v672, %v676
    %v679 = vadd.f32 %v608, %v677
    %v680 = vadd.f32 %v611, %v677
    %v681 = vadd.f32 %v616, %v677
    %v682 = vmax.f32 %v679, 0.0
    %v683 = vmax.f32 %v680, 0.0
    %v684 = vmax.f32 %v681, 0.0
    %v685 = vld [vmem:[%s9] sm:$0x1]
    %v687 = vlaneseq
    %v688 = vshrl.u32 %v687, 7
    %v689 = vsub.s32 0, %v688
    %v690 = vrot.slane %v685, %v689
    %691 = vrot.lane.b32.xlu0 %v690, 64
    %v692 = vpop.permute.xlu0 %691
    %v694 = vadd.f32 %v666, %v692
    %v695 = vadd.f32 %v669, %v692
    %v696 = vmax.f32 %v694, 0.0
    %v697 = vmax.f32 %v695, 0.0
    %v698 = vld [vmem:[#allocation13] sm:$0xff]
    %v699 = vld [vmem:[#allocation13 + $0x8] sm:$0xff]
    %v700 = vld [vmem:[#allocation13 + $0x10] sm:$0xff]
    %v701 = vld [vmem:[#allocation13 + $0x18] sm:$0xff]
    %v702 = vld [vmem:[#allocation13 + $0x20] sm:$0xff]
    %v703 = vld [vmem:[#allocation13 + $0x28] sm:$0xff]
    %v704 = vld [vmem:[#allocation13 + $0x30] sm:$0xff]
    %v705 = vld [vmem:[#allocation13 + $0x38] sm:$0xff]
    %v707 = vsel %vm370, %v682, 0
    %v710 = vsel %vm370, %v683, 0
    %v713 = vsel %vm370, %v684, 0
    %715 = vmatprep.subr.mxu0 0.0
    %716 = vmatpush1.msra.mxu0 %v698
    %717 = vmatprep.subr.mxu0 0.0
    %718 = vmatpush1.msra.mxu0 %v699
    %719 = vmatprep.subr.mxu0 0.0
    %720 = vmatpush1.msra.mxu0 %v700
    %721 = vmatprep.subr.mxu0 0.0
    %722 = vmatpush1.msra.mxu0 %v701
    %723 = vmatprep.subr.mxu0 0.0
    %724 = vmatpush1.msra.mxu0 %v702
    %725 = vmatprep.subr.mxu0 0.0
    %726 = vmatpush1.msra.mxu0 %v703
    %727 = vmatprep.subr.mxu0 0.0
    %728 = vmatpush1.msra.mxu0 %v704
    %729 = vmatprep.subr.mxu0 0.0
    %730 = vmatpush1.msra.mxu0 %v705
    %731 = vmatprep.subr.mxu0 0.0
    %732 = vmatpush1.msra.mxu0 0.0
    %733 = vmatprep.subr.mxu0 0.0
    %734 = vmatpush1.msra.mxu0 0.0
    %735 = vmatprep.subr.mxu0 0.0
    %736 = vmatpush1.msra.mxu0 0.0
    %737 = vmatprep.subr.mxu0 0.0
    %738 = vmatpush1.msra.mxu0 0.0
    %739 = vmatprep.subr.mxu0 0.0
    %740 = vmatpush1.msra.mxu0 0.0
    %741 = vmatprep.subr.mxu0 0.0
    %742 = vmatpush1.msra.mxu0 0.0
    %743 = vmatprep.subr.mxu0 0.0
    %744 = vmatpush1.msra.mxu0 0.0
    %745 = vmatprep.subr.mxu0 0.0
    %746 = vmatpush1.msra.mxu0 0.0
    %747 = vmatprep.subr.mxu0 0.0
    %748 = vmatpush1.msra.mxu0 0.0
    %749 = vmatprep.subr.mxu0 0.0
    %750 = vmatpush1.msra.mxu0 0.0
    %751 = vmatprep.subr.mxu0 0.0
    %752 = vmatpush1.msra.mxu0 0.0
    %753 = vmatprep.subr.mxu0 0.0
    %754 = vmatpush1.msra.mxu0 0.0
    %755 = vmatprep.subr.mxu0 0.0
    %756 = vmatpush1.msra.mxu0 0.0
    %757 = vmatprep.subr.mxu0 0.0
    %758 = vmatpush1.msra.mxu0 0.0
    %759 = vmatprep.subr.mxu0 0.0
    %760 = vmatpush1.msra.mxu0 0.0
    %761 = vmatprep.subr.mxu0 0.0
    %762 = vmatpush1.msra.mxu0 0.0
    %763 = vmatprep.subr.mxu0 0.0
    %764 = vmatpush1.msra.mxu0 0.0
    %765 = vmatprep.subr.mxu0 0.0
    %766 = vmatpush1.msra.mxu0 0.0
    %767 = vmatprep.subr.mxu0 0.0
    %768 = vmatpush1.msra.mxu0 0.0
    %769 = vmatprep.subr.mxu0 0.0
    %770 = vmatpush1.msra.mxu0 0.0
    %771 = vmatprep.subr.mxu0 0.0
    %772 = vmatpush1.msra.mxu0 0.0
    %773 = vmatprep.subr.mxu0 0.0
    %774 = vmatpush1.msra.mxu0 0.0
    %775 = vmatprep.subr.mxu0 0.0
    %776 = vmatpush1.msra.mxu0 0.0
    %777 = vmatprep.subr.mxu0 0.0
    %778 = vmatpush1.msra.mxu0 0.0
    %779 = vmatprep.mubr.f32.mxu0 0.0
    %780 = vmatmul.mubr.f32.gmra.mrb[0].mxu0 %v707
    %v781 = vpop.f32.mrb[0].mxu0
    %v782 = vadd.f32 0.0, %v781
    %v783 = vpop.f32.mrb[0].mxu0
    %784 = vmatprep.mubr.f32.mxu0 0.0
    %785 = vmatmul.mubr.f32.gmra.mrb[0].mxu0 %v710
    %v786 = vpop.f32.mrb[0].mxu0
    %v787 = vadd.f32 0.0, %v786
    %v788 = vpop.f32.mrb[0].mxu0
    %789 = vmatprep.mubr.f32.mxu0 0.0
    %790 = vmatmul.mubr.f32.gmra.mrb[0].mxu0 %v713
    %v791 = vpop.f32.mrb[0].mxu0
    %v792 = vadd.f32 0.0, %v791
    %v793 = vpop.f32.mrb[0].mxu0
    %794 = vdwg.mxu0
    %v795 = vld [vmem:[#allocation15] sm:$0xff]
    %v796 = vld [vmem:[#allocation15 + $0x8] sm:$0xff]
    %v797 = vld [vmem:[#allocation15 + $0x10] sm:$0xff]
    %v798 = vld [vmem:[#allocation15 + $0x18] sm:$0xff]
    %v799 = vld [vmem:[#allocation15 + $0x20] sm:$0xff]
    %v800 = vld [vmem:[#allocation15 + $0x28] sm:$0xff]
    %v801 = vld [vmem:[#allocation15 + $0x30] sm:$0xff]
    %v802 = vld [vmem:[#allocation15 + $0x38] sm:$0xff]
    %805 = vrot.lane.b32.xlu0 %v696, 64
    %v806 = vpop.permute.xlu0 %805
    %807 = vrot.lane.b32.xlu0 %v697, 64
    %v808 = vpop.permute.xlu0 %807
    %v809 = vsel %vm370, %v806, 0
    %v811 = vsel %vm370, %v808, 0
    %813 = vmatprep.subr.mxu0 0.0
    %814 = vmatpush1.msra.mxu0 %v795
    %815 = vmatprep.subr.mxu0 0.0
    %816 = vmatpush1.msra.mxu0 %v796
    %817 = vmatprep.subr.mxu0 0.0
    %818 = vmatpush1.msra.mxu0 %v797
    %819 = vmatprep.subr.mxu0 0.0
    %820 = vmatpush1.msra.mxu0 %v798
    %821 = vmatprep.subr.mxu0 0.0
    %822 = vmatpush1.msra.mxu0 %v799
    %823 = vmatprep.subr.mxu0 0.0
    %824 = vmatpush1.msra.mxu0 %v800
    %825 = vmatprep.subr.mxu0 0.0
    %826 = vmatpush1.msra.mxu0 %v801
    %827 = vmatprep.subr.mxu0 0.0
    %828 = vmatpush1.msra.mxu0 %v802
    %829 = vmatprep.subr.mxu0 0.0
    %830 = vmatpush1.msra.mxu0 0.0
    %831 = vmatprep.subr.mxu0 0.0
    %832 = vmatpush1.msra.mxu0 0.0
    %833 = vmatprep.subr.mxu0 0.0
    %834 = vmatpush1.msra.mxu0 0.0
    %835 = vmatprep.subr.mxu0 0.0
    %836 = vmatpush1.msra.mxu0 0.0
    %837 = vmatprep.subr.mxu0 0.0
    %838 = vmatpush1.msra.mxu0 0.0
    %839 = vmatprep.subr.mxu0 0.0
    %840 = vmatpush1.msra.mxu0 0.0
    %841 = vmatprep.subr.mxu0 0.0
    %842 = vmatpush1.msra.mxu0 0.0
    %843 = vmatprep.subr.mxu0 0.0
    %844 = vmatpush1.msra.mxu0 0.0
    %845 = vmatprep.subr.mxu0 0.0
    %846 = vmatpush1.msra.mxu0 0.0
    %847 = vmatprep.subr.mxu0 0.0
    %848 = vmatpush1.msra.mxu0 0.0
    %849 = vmatprep.subr.mxu0 0.0
    %850 = vmatpush1.msra.mxu0 0.0
    %851 = vmatprep.subr.mxu0 0.0
    %852 = vmatpush1.msra.mxu0 0.0
    %853 = vmatprep.subr.mxu0 0.0
    %854 = vmatpush1.msra.mxu0 0.0
    %855 = vmatprep.subr.mxu0 0.0
    %856 = vmatpush1.msra.mxu0 0.0
    %857 = vmatprep.subr.mxu0 0.0
    %858 = vmatpush1.msra.mxu0 0.0
    %859 = vmatprep.subr.mxu0 0.0
    %860 = vmatpush1.msra.mxu0 0.0
    %861 = vmatprep.subr.mxu0 0.0
    %862 = vmatpush1.msra.mxu0 0.0
    %863 = vmatprep.subr.mxu0 0.0
    %864 = vmatpush1.msra.mxu0 0.0
    %865 = vmatprep.subr.mxu0 0.0
    %866 = vmatpush1.msra.mxu0 0.0
    %867 = vmatprep.subr.mxu0 0.0
    %868 = vmatpush1.msra.mxu0 0.0
    %869 = vmatprep.subr.mxu0 0.0
    %870 = vmatpush1.msra.mxu0 0.0
    %871 = vmatprep.subr.mxu0 0.0
    %872 = vmatpush1.msra.mxu0 0.0
    %873 = vmatprep.subr.mxu0 0.0
    %874 = vmatpush1.msra.mxu0 0.0
    %875 = vmatprep.subr.mxu0 0.0
    %876 = vmatpush1.msra.mxu0 0.0
    %877 = vmatprep.mubr.f32.mxu0 0.0
    %878 = vmatmul.mubr.f32.gmra.mrb[0].mxu0 %v809
    %v879 = vpop.f32.mrb[0].mxu0
    %v880 = vadd.f32 0.0, %v879
    %v881 = vpop.f32.mrb[0].mxu0
    %882 = vmatprep.mubr.f32.mxu0 0.0
    %883 = vmatmul.mubr.f32.gmra.mrb[0].mxu0 %v811
    %v884 = vpop.f32.mrb[0].mxu0
    %v885 = vadd.f32 0.0, %v884
    %v886 = vpop.f32.mrb[0].mxu0
    %887 = vdwg.mxu0
    %v888 = vpack.c.bf16 %v787, %v782
    %v889 = vpack.c.bf16 %v880, %v792
    %v890 = vpack.c.bf16 %v885, %v885
    %v892 = vsel %vm189, %v890, 0
    %894 = vmatprep.subr.bf16.mxu0 0
    %895 = vmatpush1.bf16.msra.mxu0 %v888
    %896 = vmatprep.subr.bf16.mxu0 0
    %897 = vmatpush1.bf16.msra.mxu0 %v889
    %898 = vmatprep.subr.bf16.mxu0 0
    %899 = vmatpush1.bf16.msra.mxu0 %v892
    %900 = vmatprep.subr.bf16.mxu0 0
    %901 = vmatpush1.bf16.msra.mxu0 0
    %902 = vmatprep.subr.bf16.mxu0 0
    %903 = vmatpush1.bf16.msra.mxu0 0
    %904 = vmatprep.subr.bf16.mxu0 0
    %905 = vmatpush1.bf16.msra.mxu0 0
    %906 = vmatprep.subr.bf16.mxu0 0
    %907 = vmatpush1.bf16.msra.mxu0 0
    %908 = vmatprep.subr.bf16.mxu0 0
    %909 = vmatpush1.bf16.msra.mxu0 0
    %910 = vmatprep.subr.bf16.mxu0 0
    %911 = vmatpush1.bf16.msra.mxu0 0
    %912 = vmatprep.subr.bf16.mxu0 0
    %913 = vmatpush1.bf16.msra.mxu0 0
    %914 = vmatprep.subr.bf16.mxu0 0
    %915 = vmatpush1.bf16.msra.mxu0 0
    %916 = vmatprep.subr.bf16.mxu0 0
    %917 = vmatpush1.bf16.msra.mxu0 0
    %918 = vmatprep.subr.bf16.mxu0 0
    %919 = vmatpush1.bf16.msra.mxu0 0
    %920 = vmatprep.subr.bf16.mxu0 0
    %921 = vmatpush1.bf16.msra.mxu0 0
    %922 = vmatprep.subr.bf16.mxu0 0
    %923 = vmatpush1.bf16.msra.mxu0 0
    %924 = vmatprep.subr.bf16.mxu0 0
    %925 = vmatpush1.bf16.msra.mxu0 0
    %926 = vmatprep.mubr.bf16.mxu0 0
    %927 = vmatmul.mubr.bf16.gmra.mrb[0].mxu0 %v565
    %v928 = vpop.f32.mrb[0].mxu0
    %v929 = vadd.f32 0.0, %v928
    %v930 = vpop.f32.mrb[0].mxu0
    %v931 = vpop.f32.mrb[0].mxu0
    %v932 = vadd.f32 0.0, %v931
    %v933 = vpop.f32.mrb[0].mxu0
    %934 = vmatprep.mubr.bf16.mxu0 0
    %935 = vmatmul.mubr.bf16.gmra.mrb[0].mxu0 %v568
    %v936 = vpop.f32.mrb[0].mxu0
    %v937 = vadd.f32 0.0, %v936
    %v938 = vpop.f32.mrb[0].mxu0
    %v939 = vpop.f32.mrb[0].mxu0
    %v940 = vpop.f32.mrb[0].mxu0
    %941 = vdwg.mxu0
    %942 = vmatprep.subr.bf16.mxu0 0
    %943 = vmatpush1.bf16.msra.mxu0 %v888
    %944 = vmatprep.subr.bf16.mxu0 0
    %945 = vmatpush1.bf16.msra.mxu0 %v889
    %946 = vmatprep.subr.bf16.mxu0 0
    %947 = vmatpush1.bf16.msra.mxu0 %v892
    %948 = vmatprep.subr.bf16.mxu0 0
    %949 = vmatpush1.bf16.msra.mxu0 0
    %950 = vmatprep.subr.bf16.mxu0 0
    %951 = vmatpush1.bf16.msra.mxu0 0
    %952 = vmatprep.subr.bf16.mxu0 0
    %953 = vmatpush1.bf16.msra.mxu0 0
    %954 = vmatprep.subr.bf16.mxu0 0
    %955 = vmatpush1.bf16.msra.mxu0 0
    %956 = vmatprep.subr.bf16.mxu0 0
    %957 = vmatpush1.bf16.msra.mxu0 0
    %958 = vmatprep.subr.bf16.mxu0 0
    %959 = vmatpush1.bf16.msra.mxu0 0
    %960 = vmatprep.subr.bf16.mxu0 0
    %961 = vmatpush1.bf16.msra.mxu0 0
    %962 = vmatprep.subr.bf16.mxu0 0
    %963 = vmatpush1.bf16.msra.mxu0 0
    %964 = vmatprep.subr.bf16.mxu0 0
    %965 = vmatpush1.bf16.msra.mxu0 0
    %966 = vmatprep.subr.bf16.mxu0 0
    %967 = vmatpush1.bf16.msra.mxu0 0
    %968 = vmatprep.subr.bf16.mxu0 0
    %969 = vmatpush1.bf16.msra.mxu0 0
    %970 = vmatprep.subr.bf16.mxu0 0
    %971 = vmatpush1.bf16.msra.mxu0 0
    %972 = vmatprep.subr.bf16.mxu0 0
    %973 = vmatpush1.bf16.msra.mxu0 0
    %974 = vmatprep.mubr.bf16.mxu0 0
    %975 = vmatmul.mubr.bf16.gmra.mrb[0].mxu0 %v629
    %v976 = vpop.f32.mrb[0].mxu0
    %v977 = vadd.f32 0.0, %v976
    %v978 = vpop.f32.mrb[0].mxu0
    %v979 = vpop.f32.mrb[0].mxu0
    %v980 = vadd.f32 0.0, %v979
    %v981 = vpop.f32.mrb[0].mxu0
    %982 = vdwg.mxu0
    %v983 = vld [vmem:[%s12] sm:$0x1]
    %v985 = vlaneseq
    %v986 = vshrl.u32 %v985, 7
    %v987 = vsub.s32 0, %v986
    %v988 = vrot.slane %v983, %v987
    %v990 = vadd.f32 %v929, %v988
    %v991 = vadd.f32 %v932, %v988
    %v992 = vadd.f32 %v937, %v988
    %v993 = vmax.f32 %v990, 0.0
    %v994 = vmax.f32 %v991, 0.0
    %v995 = vmax.f32 %v992, 0.0
    %v996 = vld [vmem:[%s13] sm:$0x1]
    %v998 = vlaneseq
    %v999 = vshrl.u32 %v998, 7
    %v1000 = vsub.s32 0, %v999
    %v1001 = vrot.slane %v996, %v1000
    %1002 = vrot.lane.b32.xlu0 %v1001, 32
    %v1003 = vpop.permute.xlu0 %1002
    %v1005 = vadd.f32 %v977, %v1003
    %v1006 = vadd.f32 %v980, %v1003
    %v1007 = vmax.f32 %v1005, 0.0
    %v1008 = vmax.f32 %v1006, 0.0
    %v1009 = vld [vmem:[%s14] sm:$0xff]
    %v1010 = vld [vmem:[%s14 + $0x8] sm:$0xff]
    %v1011 = vld [vmem:[%s14 + $0x10] sm:$0xff]
    %v1012 = vld [vmem:[%s14 + $0x18] sm:$0xff]
    %vm1013 = vcmask 261120
    %v1015 = vsel %vm1013, %v993, 0
    %v1018 = vsel %vm1013, %v994, 0
    %v1021 = vsel %vm1013, %v995, 0
    %1023 = vmatprep.subr.mxu0 0.0
    %1024 = vmatpush1.msra.mxu0 %v1009
    %1025 = vmatprep.subr.mxu0 0.0
    %1026 = vmatpush1.msra.mxu0 %v1010
    %1027 = vmatprep.subr.mxu0 0.0
    %1028 = vmatpush1.msra.mxu0 %v1011
    %1029 = vmatprep.subr.mxu0 0.0
    %1030 = vmatpush1.msra.mxu0 %v1012
    %1031 = vmatprep.subr.mxu0 0.0
    %1032 = vmatpush1.msra.mxu0 0.0
    %1033 = vmatprep.subr.mxu0 0.0
    %1034 = vmatpush1.msra.mxu0 0.0
    %1035 = vmatprep.subr.mxu0 0.0
    %1036 = vmatpush1.msra.mxu0 0.0
    %1037 = vmatprep.subr.mxu0 0.0
    %1038 = vmatpush1.msra.mxu0 0.0
    %1039 = vmatprep.subr.mxu0 0.0
    %1040 = vmatpush1.msra.mxu0 0.0
    %1041 = vmatprep.subr.mxu0 0.0
    %1042 = vmatpush1.msra.mxu0 0.0
    %1043 = vmatprep.subr.mxu0 0.0
    %1044 = vmatpush1.msra.mxu0 0.0
    %1045 = vmatprep.subr.mxu0 0.0
    %1046 = vmatpush1.msra.mxu0 0.0
    %1047 = vmatprep.subr.mxu0 0.0
    %1048 = vmatpush1.msra.mxu0 0.0
    %1049 = vmatprep.subr.mxu0 0.0
    %1050 = vmatpush1.msra.mxu0 0.0
    %1051 = vmatprep.subr.mxu0 0.0
    %1052 = vmatpush1.msra.mxu0 0.0
    %1053 = vmatprep.subr.mxu0 0.0
    %1054 = vmatpush1.msra.mxu0 0.0
    %1055 = vmatprep.subr.mxu0 0.0
    %1056 = vmatpush1.msra.mxu0 0.0
    %1057 = vmatprep.subr.mxu0 0.0
    %1058 = vmatpush1.msra.mxu0 0.0
    %1059 = vmatprep.subr.mxu0 0.0
    %1060 = vmatpush1.msra.mxu0 0.0
    %1061 = vmatprep.subr.mxu0 0.0
    %1062 = vmatpush1.msra.mxu0 0.0
    %1063 = vmatprep.subr.mxu0 0.0
    %1064 = vmatpush1.msra.mxu0 0.0
    %1065 = vmatprep.subr.mxu0 0.0
    %1066 = vmatpush1.msra.mxu0 0.0
    %1067 = vmatprep.subr.mxu0 0.0
    %1068 = vmatpush1.msra.mxu0 0.0
    %1069 = vmatprep.subr.mxu0 0.0
    %1070 = vmatpush1.msra.mxu0 0.0
    %1071 = vmatprep.subr.mxu0 0.0
    %1072 = vmatpush1.msra.mxu0 0.0
    %1073 = vmatprep.subr.mxu0 0.0
    %1074 = vmatpush1.msra.mxu0 0.0
    %1075 = vmatprep.subr.mxu0 0.0
    %1076 = vmatpush1.msra.mxu0 0.0
    %1077 = vmatprep.subr.mxu0 0.0
    %1078 = vmatpush1.msra.mxu0 0.0
    %1079 = vmatprep.subr.mxu0 0.0
    %1080 = vmatpush1.msra.mxu0 0.0
    %1081 = vmatprep.subr.mxu0 0.0
    %1082 = vmatpush1.msra.mxu0 0.0
    %1083 = vmatprep.subr.mxu0 0.0
    %1084 = vmatpush1.msra.mxu0 0.0
    %1085 = vmatprep.subr.mxu0 0.0
    %1086 = vmatpush1.msra.mxu0 0.0
    %1087 = vmatprep.mubr.f32.mxu0 0.0
    %1088 = vmatmul.mubr.f32.gmra.mrb[0].mxu0 %v1015
    %v1089 = vpop.f32.mrb[0].mxu0
    %v1090 = vadd.f32 0.0, %v1089
    %v1091 = vpop.f32.mrb[0].mxu0
    %1092 = vmatprep.mubr.f32.mxu0 0.0
    %1093 = vmatmul.mubr.f32.gmra.mrb[0].mxu0 %v1018
    %v1094 = vpop.f32.mrb[0].mxu0
    %v1095 = vadd.f32 0.0, %v1094
    %v1096 = vpop.f32.mrb[0].mxu0
    %1097 = vmatprep.mubr.f32.mxu0 0.0
    %1098 = vmatmul.mubr.f32.gmra.mrb[0].mxu0 %v1021
    %v1099 = vpop.f32.mrb[0].mxu0
    %v1100 = vadd.f32 0.0, %v1099
    %v1101 = vpop.f32.mrb[0].mxu0
    %1102 = vdwg.mxu0
    %1105 = vrot.lane.b32.xlu0 %v1007, 96
    %v1106 = vpop.permute.xlu0 %1105
    %1107 = vrot.lane.b32.xlu0 %v1008, 96
    %v1108 = vpop.permute.xlu0 %1107
    %v1110 = vsel %vm1013, %v1090, 0
    %v1113 = vsel %vm1013, %v1095, 0
    %v1116 = vsel %vm1013, %v1100, 0
    %v1118 = vsel %vm1013, %v1106, 0
    %v1120 = vsel %vm1013, %v1108, 0
    %1122 = vmatprep.subr.mxu0 0.0
    %1123 = vmatpush1.xpose.msra.mxu0 %v1118
    %1124 = vmatprep.subr.mxu0 0.0
    %1125 = vmatpush1.xpose.msra.mxu0 %v1120
    %1126 = vmatprep.subr.mxu0 0.0
    %1127 = vmatpush1.xpose.msra.mxu0 0.0
    %1128 = vmatprep.subr.mxu0 0.0
    %1129 = vmatpush1.xpose.msra.mxu0 0.0
    %1130 = vmatprep.subr.mxu0 0.0
    %1131 = vmatpush1.xpose.msra.mxu0 0.0
    %1132 = vmatprep.subr.mxu0 0.0
    %1133 = vmatpush1.xpose.msra.mxu0 0.0
    %1134 = vmatprep.subr.mxu0 0.0
    %1135 = vmatpush1.xpose.msra.mxu0 0.0
    %1136 = vmatprep.subr.mxu0 0.0
    %1137 = vmatpush1.xpose.msra.mxu0 0.0
    %1138 = vmatprep.subr.mxu0 0.0
    %1139 = vmatpush1.xpose.msra.mxu0 0.0
    %1140 = vmatprep.subr.mxu0 0.0
    %1141 = vmatpush1.xpose.msra.mxu0 0.0
    %1142 = vmatprep.subr.mxu0 0.0
    %1143 = vmatpush1.xpose.msra.mxu0 0.0
    %1144 = vmatprep.subr.mxu0 0.0
    %1145 = vmatpush1.xpose.msra.mxu0 0.0
    %1146 = vmatprep.subr.mxu0 0.0
    %1147 = vmatpush1.xpose.msra.mxu0 0.0
    %1148 = vmatprep.subr.mxu0 0.0
    %1149 = vmatpush1.xpose.msra.mxu0 0.0
    %1150 = vmatprep.subr.mxu0 0.0
    %1151 = vmatpush1.xpose.msra.mxu0 0.0
    %1152 = vmatprep.subr.mxu0 0.0
    %1153 = vmatpush1.xpose.msra.mxu0 0.0
    %1154 = vmatprep.subr.mxu0 0.0
    %1155 = vmatpush1.xpose.msra.mxu0 0.0
    %1156 = vmatprep.subr.mxu0 0.0
    %1157 = vmatpush1.xpose.msra.mxu0 0.0
    %1158 = vmatprep.subr.mxu0 0.0
    %1159 = vmatpush1.xpose.msra.mxu0 0.0
    %1160 = vmatprep.subr.mxu0 0.0
    %1161 = vmatpush1.xpose.msra.mxu0 0.0
    %1162 = vmatprep.subr.mxu0 0.0
    %1163 = vmatpush1.xpose.msra.mxu0 0.0
    %1164 = vmatprep.subr.mxu0 0.0
    %1165 = vmatpush1.xpose.msra.mxu0 0.0
    %1166 = vmatprep.subr.mxu0 0.0
    %1167 = vmatpush1.xpose.msra.mxu0 0.0
    %1168 = vmatprep.subr.mxu0 0.0
    %1169 = vmatpush1.xpose.msra.mxu0 0.0
    %1170 = vmatprep.subr.mxu0 0.0
    %1171 = vmatpush1.xpose.msra.mxu0 0.0
    %1172 = vmatprep.subr.mxu0 0.0
    %1173 = vmatpush1.xpose.msra.mxu0 0.0
    %1174 = vmatprep.subr.mxu0 0.0
    %1175 = vmatpush1.xpose.msra.mxu0 0.0
    %1176 = vmatprep.subr.mxu0 0.0
    %1177 = vmatpush1.xpose.msra.mxu0 0.0
    %1178 = vmatprep.subr.mxu0 0.0
    %1179 = vmatpush1.xpose.msra.mxu0 0.0
    %1180 = vmatprep.subr.mxu0 0.0
    %1181 = vmatpush1.xpose.msra.mxu0 0.0
    %1182 = vmatprep.subr.mxu0 0.0
    %1183 = vmatpush1.xpose.msra.mxu0 0.0
    %1184 = vmatprep.subr.mxu0 0.0
    %1185 = vmatpush1.xpose.msra.mxu0 0.0
    %1186 = vmatprep.mubr.f32.mxu0 0.0
    %1187 = vmatmul.mubr.f32.gmra.mrb[0].mxu0 %v1110
    %v1188 = vpop.f32.mrb[0].mxu0
    %v1189 = vadd.f32 0.0, %v1188
    %v1190 = vpop.f32.mrb[0].mxu0
    %1191 = vmatprep.mubr.f32.mxu0 0.0
    %1192 = vmatmul.mubr.f32.gmra.mrb[0].mxu0 %v1113
    %v1193 = vpop.f32.mrb[0].mxu0
    %v1194 = vadd.f32 0.0, %v1193
    %v1195 = vpop.f32.mrb[0].mxu0
    %1196 = vmatprep.mubr.f32.mxu0 0.0
    %1197 = vmatmul.mubr.f32.gmra.mrb[0].mxu0 %v1116
    %v1198 = vpop.f32.mrb[0].mxu0
    %v1199 = vadd.f32 0.0, %v1198
    %v1200 = vpop.f32.mrb[0].mxu0
    %1201 = vdwg.mxu0
    %vm1202 = vcmask 130048
    %1203 = vst.msk [vmem:[%s15] sm:$0xff] %vm1202, %v1189
    %1204 = vst.msk [vmem:[%s15 + $0x8] sm:$0xff] %vm1202, %v1194
    %1205 = vst.msk [vmem:[%s15 + $0x10] sm:$0xff] %vm1202, %v1199
    // Predicated region
    $region98: #{tpu_custom_call.1} parent=1 // pred_check
      _
    $region99: #{tpu_custom_call.1} parent=1 // pred_check_branch
      %1207 = sbr.rel (0) target = $region101
    $region100: #{tpu_custom_call.1} parent=1 // pred_region
      _
    $region101: #{tpu_custom_call.1} parent=1 // pred_fallthru
      _
    // Predicated region
    $region102: #{tpu_custom_call.1} parent=1 // pred_check
      _
    $region103: #{tpu_custom_call.1} parent=1 // pred_check_branch
      %1209 = sbr.rel (0) target = $region105
    $region104: #{tpu_custom_call.1} parent=1 // pred_region
      _
    $region105: #{tpu_custom_call.1} parent=1 // pred_fallthru
      _
    %1210 = vsyncpa [#allocation3], 1
    %1211 = vsyncpa [#allocation5], 1
    %1212 = vsyncpa [#allocation8], 1
    %1213 = vsyncpa [#allocation11], 1
    %1214 = vsyncpa [#allocation14], 1

</llo_original>
